<compile_context>
chip_gen: v7x
topology: tpu7x:2x2x1
jax: 0.10.0
libtpu: 0.0.40
codegen_flags: <defaults>
</compile_context>

<pallas_src>
import math

import jax
import jax.numpy as jnp
from jax.experimental import pallas as pl
from jax.experimental.pallas import tpu as pltpu

_NEG_BIG = -1.0e30  # logit value for padded vocab columns (exp() underflows to 0)


def _generator_kernel(x_ref, wp_ref, bp_ref, wmix_ref, bmix_ref, o_ref):
    # x_ref:    (TN, d_model)   compute dtype (bf16 or f32)
    # wp_ref:   (d_model, Hp)   compute dtype     bp_ref:   (1, Hp)  f32
    # wmix_ref: (Hp, Vp)        compute dtype     bmix_ref: (1, Vp)  f32
    # o_ref:    (TN, Vp)        out dtype
    x = x_ref[...]

    # proj: (TN, d_model) @ (d_model, Hp) + b  -> (TN, Hp), f32 accumulation.
    h = jnp.dot(x, wp_ref[...], preferred_element_type=jnp.float32) + bp_ref[...]

    # Single fused vocab projection (mask already folded into W_mix / b_mix).
    # Feed the MXU in the compute dtype; keep the f32 accumulation.
    h = h.astype(wmix_ref.dtype)
    y = jnp.dot(h, wmix_ref[...], preferred_element_type=jnp.float32) + bmix_ref[...]

    # Numerically stable log_softmax over the (full, padded) vocab dim.
    # Padded columns sit at ~-1e30 and contribute exp() == 0.
    y_max = jnp.max(y, axis=-1, keepdims=True)
    shifted = y - y_max
    lse = jnp.log(jnp.sum(jnp.exp(shifted), axis=-1, keepdims=True))
    o_ref[...] = (shifted - lse).astype(o_ref.dtype)


def generator_forward(x, w_proj, b_proj, w1, w2, b2, mask, *,
                      compute_dtype=jnp.bfloat16, out_dtype=jnp.float32,
                      tile_n=None):
    """Forward pass of `my_generator`.

    x:      (..., d_model)
    w_proj: (d_model, 300)   b_proj: (300,)
    w1:     (300, vocab)     (frozen linear1, zero bias)
    w2:     (300, vocab)     b2: (vocab,)
    mask:   (vocab,) with values in {0, 1}
    returns (..., vocab) log-probabilities in `out_dtype`.
    """
    *lead, d_model = x.shape
    h_dim = w_proj.shape[1]
    vocab = w1.shape[1]
    n = math.prod(lead) if lead else 1

    # ---- Fold the binary mask into a single mixed weight / bias (exact). ----
    mask_f = mask.astype(jnp.float32).reshape(1, vocab)
    w_mix = (1.0 - mask_f) * w1.astype(jnp.float32) + mask_f * w2.astype(jnp.float32)
    b_mix = mask_f * b2.astype(jnp.float32).reshape(1, vocab)

    # ---- Pad vocab to a multiple of 128 (lane-dense output stores). ---------
    v_pad = pl.cdiv(vocab, 128) * 128
    pad_v = v_pad - vocab
    w_mixp = jnp.pad(w_mix, ((0, 0), (0, pad_v)))
    b_mixp = jnp.pad(b_mix, ((0, 0), (0, pad_v)), constant_values=_NEG_BIG)

    # ---- Pad hidden 300 -> multiple of 128 (384): clean MXU K dim. ----------
    h_pad = pl.cdiv(h_dim, 128) * 128
    pad_h = h_pad - h_dim
    wp = jnp.pad(w_proj.astype(jnp.float32), ((0, 0), (0, pad_h)))
    bp = jnp.pad(b_proj.astype(jnp.float32), ((0, pad_h),)).reshape(1, h_pad)
    w_mixp = jnp.pad(w_mixp, ((0, pad_h), (0, 0)))

    # ---- Narrow MXU operands; biases stay f32. -------------------------------
    wp_c = wp.astype(compute_dtype)
    w_mix_c = w_mixp.astype(compute_dtype)
    xf = x.reshape(n, d_model).astype(compute_dtype)   # no forced f32 upcast

    # ---- Generation-aware VMEM budget and row-tile selection. ---------------
    try:
        vmem_cap = int(pltpu.get_tpu_info().vmem_capacity_bytes)
    except Exception:
        vmem_cap = 64 << 20  # conservative (v7x per-TensorCore) fallback
    budget = int(0.85 * vmem_cap)

    csize = jnp.dtype(compute_dtype).itemsize
    osize = jnp.dtype(out_dtype).itemsize

    def need_bytes(tn):
        # Weights counted ONCE (single-buffered, grid-invariant index maps).
        resident = (d_model * h_pad + h_pad * v_pad) * csize + (h_pad + v_pad) * 4
        # Double-buffered streaming tiles (x in, logprobs out).
        pipelined = 2 * tn * d_model * csize + 2 * tn * v_pad * osize
        # In-kernel f32 temporaries: h (Hp) plus ~3 logits-sized slabs
        # (y / shifted / exp(shifted)) — conservative.
        temps = tn * (h_pad * 4 + 3 * v_pad * 4)
        return resident + pipelined + temps

    if tile_n is None:
        tile_n = 8
        for cand in (512, 256, 128, 64, 32, 16, 8):
            tile_n = cand
            if need_bytes(cand) <= budget:
                break
    n8 = pl.cdiv(n, 8) * 8
    tile_n = max(8, min((tile_n // 8) * 8, n8))
    n_pad = pl.cdiv(n, tile_n) * tile_n
    xf = jnp.pad(xf, ((0, n_pad - n), (0, 0)))

    vmem_limit = int(min(vmem_cap - (2 << 20),
                         max(32 << 20, need_bytes(tile_n) + (8 << 20))))

    def _call(weight_mode):
        kw = {} if weight_mode is None else {"pipeline_mode": weight_mode}
        grid_spec = pltpu.PrefetchScalarGridSpec(
            num_scalar_prefetch=0,
            grid=(n_pad // tile_n,),
            in_specs=[
                pl.BlockSpec((tile_n, d_model), lambda i: (i, 0)),       # x tile
                pl.BlockSpec((d_model, h_pad), lambda i: (0, 0), **kw),  # W_proj
                pl.BlockSpec((1, h_pad), lambda i: (0, 0), **kw),        # b_proj
                pl.BlockSpec((h_pad, v_pad), lambda i: (0, 0), **kw),    # W_mix
                pl.BlockSpec((1, v_pad), lambda i: (0, 0), **kw),        # b_mix
            ],
            out_specs=pl.BlockSpec((tile_n, v_pad), lambda i: (i, 0)),
        )
        res = pl.pallas_call(
            _generator_kernel,
            out_shape=jax.ShapeDtypeStruct((n_pad, v_pad), out_dtype),
            grid_spec=grid_spec,
            compiler_params=pltpu.CompilerParams(
                dimension_semantics=("parallel",),
                vmem_limit_bytes=vmem_limit),
        )(xf, wp_c, bp, w_mix_c, b_mixp)
        return jax.block_until_ready(res)

    try:
        # Single-buffer the grid-invariant weights (halves their VMEM footprint).
        out = _call(pl.Buffered(1))
    except Exception:
        # TODO(synk): some JAX builds reject buffer_count=1; fall back to the
        # default double-buffered pipeline for the weights.
        out = _call(None)

    return out[:n, :vocab].reshape(*lead, vocab)


def generator_reference(x, w_proj, b_proj, w1, w2, b2, mask):
    h = x @ w_proj + b_proj
    y1 = h @ w1
    y2 = h @ w2 + b2
    y = (1.0 - mask) * y1 + mask * y2
    return jax.nn.log_softmax(y, axis=-1)


if __name__ == "__main__":
    batch, seq = 2, 8
    d_model, vocab_size = 32, 64
    hidden = 300  # fixed by the module definition

    key = jax.random.PRNGKey(0)
    k_x, k_wp, k_bp, k_w1, k_w2, k_b2, k_m = jax.random.split(key, 7)

    x = jax.random.normal(k_x, (batch, seq, d_model), dtype=jnp.float32)
    w_proj = jax.random.normal(k_wp, (d_model, hidden), dtype=jnp.float32) * 0.05
    b_proj = jax.random.normal(k_bp, (hidden,), dtype=jnp.float32) * 0.05
    # TODO(synk): linear1 weights and mask come from torch.load(...) in the
    # original module; deterministic random stand-ins are used here.
    w1 = jax.random.normal(k_w1, (hidden, vocab_size), dtype=jnp.float32) * 0.05
    w2 = jax.random.normal(k_w2, (hidden, vocab_size), dtype=jnp.float32) * 0.05
    b2 = jax.random.normal(k_b2, (vocab_size,), dtype=jnp.float32) * 0.05
    mask = jax.random.bernoulli(k_m, 0.5, (vocab_size,)).astype(jnp.float32)

    ref = generator_reference(x, w_proj, b_proj, w1, w2, b2, mask)

    # f32 compute path: tight check against the reference.
    out_f32 = generator_forward(x, w_proj, b_proj, w1, w2, b2, mask,
                                compute_dtype=jnp.float32)
    out_f32 = jax.block_until_ready(out_f32)
    assert out_f32.shape == (batch, seq, vocab_size), out_f32.shape
    assert bool(jnp.all(jnp.isfinite(out_f32))), "non-finite outputs (f32 path)"
    assert jnp.allclose(out_f32, ref, atol=1e-4, rtol=1e-4), "f32 path mismatch"

    # Default bf16-MXU path: f32 accumulation, looser tolerance vs f32 reference.
    out = generator_forward(x, w_proj, b_proj, w1, w2, b2, mask)
    out = jax.block_until_ready(out)
    assert out.shape == (batch, seq, vocab_size), out.shape
    assert bool(jnp.all(jnp.isfinite(out))), "non-finite outputs (bf16 path)"
    assert jnp.allclose(out, ref, atol=2e-2, rtol=2e-2), "bf16 path mismatch"

    print("KERNEL_OK")
</pallas_src>

<mosaic_0001>
module attributes {stable_mosaic.version = 11 : i64} {
  func.func @_generator_kernel(%arg0: i32, %arg1: memref<16x32xf32, #tpu.memory_space<vmem>>, %arg2: memref<32x384xf32, #tpu.memory_space<vmem>>, %arg3: memref<1x384xf32, #tpu.memory_space<vmem>>, %arg4: memref<384x128xf32, #tpu.memory_space<vmem>>, %arg5: memref<1x128xf32, #tpu.memory_space<vmem>>, %arg6: memref<16x128xf32, #tpu.memory_space<vmem>>) attributes {dimension_semantics = [#tpu.dimension_semantics<parallel>], iteration_bounds = array<i64: 1>, scalar_prefetch = 0 : i64, scratch_operands = 0 : i64, tpu.core_type = #tpu.core_type<tc>, window_params = [{transform_indices = @transform_0, window_bounds = array<i64: 16, 32>}, {pipeline_mode = #tpu.pipeline_mode<synchronous>, transform_indices = @transform_1, window_bounds = array<i64: 32, 384>}, {pipeline_mode = #tpu.pipeline_mode<synchronous>, transform_indices = @transform_2, window_bounds = array<i64: 1, 384>}, {pipeline_mode = #tpu.pipeline_mode<synchronous>, transform_indices = @transform_3, window_bounds = array<i64: 384, 128>}, {pipeline_mode = #tpu.pipeline_mode<synchronous>, transform_indices = @transform_4, window_bounds = array<i64: 1, 128>}, {transform_indices = @transform_5, window_bounds = array<i64: 16, 128>}]} {
    %c0 = arith.constant 0 : index
    %c0_0 = arith.constant 0 : index
    %0 = vector.load %arg1[%c0, %c0_0] : memref<16x32xf32, #tpu.memory_space<vmem>>, vector<16x32xf32>
    %c0_1 = arith.constant 0 : index
    %c0_2 = arith.constant 0 : index
    %1 = vector.load %arg2[%c0_1, %c0_2] : memref<32x384xf32, #tpu.memory_space<vmem>>, vector<32x384xf32>
    %cst = arith.constant dense<0.000000e+00> : vector<16x384xf32>
    %2 = tpu.matmul %0, %1, %cst {dimension_numbers = #tpu.dot_dimension_numbers<[1], [0], [0], [1], [0, 0, 1, 1], [], []>} : vector<16x32xf32>, vector<32x384xf32>, vector<16x384xf32> -> vector<16x384xf32>
    %c0_3 = arith.constant 0 : index
    %c0_4 = arith.constant 0 : index
    %3 = vector.load %arg3[%c0_3, %c0_4] : memref<1x384xf32, #tpu.memory_space<vmem>>, vector<1x384xf32>
    %4 = vector.broadcast %3 : vector<1x384xf32> to vector<16x384xf32>
    %5 = arith.addf %2, %4 : vector<16x384xf32>
    %c0_5 = arith.constant 0 : index
    %c0_6 = arith.constant 0 : index
    %6 = vector.load %arg4[%c0_5, %c0_6] : memref<384x128xf32, #tpu.memory_space<vmem>>, vector<384x128xf32>
    %cst_7 = arith.constant dense<0.000000e+00> : vector<16x128xf32>
    %7 = tpu.matmul %5, %6, %cst_7 {dimension_numbers = #tpu.dot_dimension_numbers<[1], [0], [0], [1], [0, 0, 1, 1], [], []>} : vector<16x384xf32>, vector<384x128xf32>, vector<16x128xf32> -> vector<16x128xf32>
    %c0_8 = arith.constant 0 : index
    %c0_9 = arith.constant 0 : index
    %8 = vector.load %arg5[%c0_8, %c0_9] : memref<1x128xf32, #tpu.memory_space<vmem>>, vector<1x128xf32>
    %9 = vector.broadcast %8 : vector<1x128xf32> to vector<16x128xf32>
    %10 = arith.addf %7, %9 : vector<16x128xf32>
    %cst_10 = arith.constant dense<0xFF800000> : vector<16xf32>
    %11 = vector.multi_reduction <maximumf>, %10, %cst_10 [1] : vector<16x128xf32> to vector<16xf32>
    %12 = vector.shape_cast %11 : vector<16xf32> to vector<16x1xf32>
    %13 = vector.broadcast %12 : vector<16x1xf32> to vector<16x128xf32>
    %14 = arith.subf %10, %13 : vector<16x128xf32>
    %15 = math.exp %14 : vector<16x128xf32>
    %cst_11 = arith.constant dense<0.000000e+00> : vector<16xf32>
    %16 = vector.multi_reduction <add>, %15, %cst_11 [1] : vector<16x128xf32> to vector<16xf32>
    %17 = vector.shape_cast %16 : vector<16xf32> to vector<16x1xf32>
    %18 = math.log %17 : vector<16x1xf32>
    %19 = vector.broadcast %18 : vector<16x1xf32> to vector<16x128xf32>
    %20 = arith.subf %14, %19 : vector<16x128xf32>
    %c0_12 = arith.constant 0 : index
    %c0_13 = arith.constant 0 : index
    %21 = vector.load %arg6[%c0_12, %c0_13] : memref<16x128xf32, #tpu.memory_space<vmem>>, vector<16x128xf32>
    tpu.vector_store %arg6[%c0_12, %c0_13], %20 {strides = array<i32>} : memref<16x128xf32, #tpu.memory_space<vmem>>, vector<16x128xf32>,
    return
  }
  func.func @transform_0(%arg0: i32) -> (i32, i32) {
    %c0_i32 = arith.constant 0 : i32
    %c0_i32_0 = arith.constant 0 : i32
    return %arg0, %c0_i32 : i32, i32
  }
  func.func @transform_1(%arg0: i32) -> (i32, i32) {
    %c0_i32 = arith.constant 0 : i32
    %c0_i32_0 = arith.constant 0 : i32
    %c0_i32_1 = arith.constant 0 : i32
    return %c0_i32, %c0_i32_0 : i32, i32
  }
  func.func @transform_2(%arg0: i32) -> (i32, i32) {
    %c0_i32 = arith.constant 0 : i32
    %c0_i32_0 = arith.constant 0 : i32
    %c0_i32_1 = arith.constant 0 : i32
    return %c0_i32, %c0_i32_0 : i32, i32
  }
  func.func @transform_3(%arg0: i32) -> (i32, i32) {
    %c0_i32 = arith.constant 0 : i32
    %c0_i32_0 = arith.constant 0 : i32
    %c0_i32_1 = arith.constant 0 : i32
    return %c0_i32, %c0_i32_0 : i32, i32
  }
  func.func @transform_4(%arg0: i32) -> (i32, i32) {
    %c0_i32 = arith.constant 0 : i32
    %c0_i32_0 = arith.constant 0 : i32
    %c0_i32_1 = arith.constant 0 : i32
    return %c0_i32, %c0_i32_0 : i32, i32
  }
  func.func @transform_5(%arg0: i32) -> (i32, i32) {
    %c0_i32 = arith.constant 0 : i32
    %c0_i32_0 = arith.constant 0 : i32
    return %arg0, %c0_i32 : i32, i32
  }
}

module attributes {stable_mosaic.version = 11 : i64} {
  func.func @_generator_kernel(%arg0: i32, %arg1: memref<16x32xf32, #tpu.memory_space<vmem>>, %arg2: memref<32x384xf32, #tpu.memory_space<vmem>>, %arg3: memref<1x384xf32, #tpu.memory_space<vmem>>, %arg4: memref<384x128xf32, #tpu.memory_space<vmem>>, %arg5: memref<1x128xf32, #tpu.memory_space<vmem>>, %arg6: memref<16x128xf32, #tpu.memory_space<vmem>>) attributes {dimension_semantics = [#tpu.dimension_semantics<parallel>], iteration_bounds = array<i64: 1>, scalar_prefetch = 0 : i64, scratch_operands = 0 : i64, tpu.core_type = #tpu.core_type<tc>, window_params = [{transform_indices = @transform_0, window_bounds = array<i64: 16, 32>}, {pipeline_mode = #tpu.pipeline_mode<synchronous>, transform_indices = @transform_1, window_bounds = array<i64: 32, 384>}, {pipeline_mode = #tpu.pipeline_mode<synchronous>, transform_indices = @transform_2, window_bounds = array<i64: 1, 384>}, {pipeline_mode = #tpu.pipeline_mode<synchronous>, transform_indices = @transform_3, window_bounds = array<i64: 384, 128>}, {pipeline_mode = #tpu.pipeline_mode<synchronous>, transform_indices = @transform_4, window_bounds = array<i64: 1, 128>}, {transform_indices = @transform_5, window_bounds = array<i64: 16, 128>}]} {
    %c0 = arith.constant 0 : index
    %c0_0 = arith.constant 0 : index
    %0 = vector.load %arg1[%c0, %c0_0] : memref<16x32xf32, #tpu.memory_space<vmem>>, vector<16x32xf32>
    %c0_1 = arith.constant 0 : index
    %c0_2 = arith.constant 0 : index
    %1 = vector.load %arg2[%c0_1, %c0_2] : memref<32x384xf32, #tpu.memory_space<vmem>>, vector<32x384xf32>
    %cst = arith.constant dense<0.000000e+00> : vector<16x384xf32>
    %2 = tpu.matmul %0, %1, %cst {dimension_numbers = #tpu.dot_dimension_numbers<[1], [0], [0], [1], [0, 0, 1, 1], [], []>} : vector<16x32xf32>, vector<32x384xf32>, vector<16x384xf32> -> vector<16x384xf32>
    %c0_3 = arith.constant 0 : index
    %c0_4 = arith.constant 0 : index
    %3 = vector.load %arg3[%c0_3, %c0_4] : memref<1x384xf32, #tpu.memory_space<vmem>>, vector<1x384xf32>
    %4 = vector.broadcast %3 : vector<1x384xf32> to vector<16x384xf32>
    %5 = arith.addf %2, %4 : vector<16x384xf32>
    %c0_5 = arith.constant 0 : index
    %c0_6 = arith.constant 0 : index
    %6 = vector.load %arg4[%c0_5, %c0_6] : memref<384x128xf32, #tpu.memory_space<vmem>>, vector<384x128xf32>
    %cst_7 = arith.constant dense<0.000000e+00> : vector<16x128xf32>
    %7 = tpu.matmul %5, %6, %cst_7 {dimension_numbers = #tpu.dot_dimension_numbers<[1], [0], [0], [1], [0, 0, 1, 1], [], []>} : vector<16x384xf32>, vector<384x128xf32>, vector<16x128xf32> -> vector<16x128xf32>
    %c0_8 = arith.constant 0 : index
    %c0_9 = arith.constant 0 : index
    %8 = vector.load %arg5[%c0_8, %c0_9] : memref<1x128xf32, #tpu.memory_space<vmem>>, vector<1x128xf32>
    %9 = vector.broadcast %8 : vector<1x128xf32> to vector<16x128xf32>
    %10 = arith.addf %7, %9 : vector<16x128xf32>
    %cst_10 = arith.constant dense<0xFF800000> : vector<16xf32>
    %11 = vector.multi_reduction <maximumf>, %10, %cst_10 [1] : vector<16x128xf32> to vector<16xf32>
    %12 = vector.shape_cast %11 : vector<16xf32> to vector<16x1xf32>
    %13 = vector.broadcast %12 : vector<16x1xf32> to vector<16x128xf32>
    %14 = arith.subf %10, %13 : vector<16x128xf32>
    %15 = math.exp %14 : vector<16x128xf32>
    %cst_11 = arith.constant dense<0.000000e+00> : vector<16xf32>
    %16 = vector.multi_reduction <add>, %15, %cst_11 [1] : vector<16x128xf32> to vector<16xf32>
    %17 = vector.shape_cast %16 : vector<16xf32> to vector<16x1xf32>
    %18 = math.log %17 : vector<16x1xf32>
    %19 = vector.broadcast %18 : vector<16x1xf32> to vector<16x128xf32>
    %20 = arith.subf %14, %19 : vector<16x128xf32>
    %c0_12 = arith.constant 0 : index
    %c0_13 = arith.constant 0 : index
    %21 = vector.load %arg6[%c0_12, %c0_13] : memref<16x128xf32, #tpu.memory_space<vmem>>, vector<16x128xf32>
    tpu.vector_store %arg6[%c0_12, %c0_13], %20 {strides = array<i32>} : memref<16x128xf32, #tpu.memory_space<vmem>>, vector<16x128xf32>,
    return
  }
  func.func @transform_0(%arg0: i32) -> (i32, i32) {
    %c0_i32 = arith.constant 0 : i32
    %c0_i32_0 = arith.constant 0 : i32
    return %arg0, %c0_i32 : i32, i32
  }
  func.func @transform_1(%arg0: i32) -> (i32, i32) {
    %c0_i32 = arith.constant 0 : i32
    %c0_i32_0 = arith.constant 0 : i32
    %c0_i32_1 = arith.constant 0 : i32
    return %c0_i32, %c0_i32_0 : i32, i32
  }
  func.func @transform_2(%arg0: i32) -> (i32, i32) {
    %c0_i32 = arith.constant 0 : i32
    %c0_i32_0 = arith.constant 0 : i32
    %c0_i32_1 = arith.constant 0 : i32
    return %c0_i32, %c0_i32_0 : i32, i32
  }
  func.func @transform_3(%arg0: i32) -> (i32, i32) {
    %c0_i32 = arith.constant 0 : i32
    %c0_i32_0 = arith.constant 0 : i32
    %c0_i32_1 = arith.constant 0 : i32
    return %c0_i32, %c0_i32_0 : i32, i32
  }
  func.func @transform_4(%arg0: i32) -> (i32, i32) {
    %c0_i32 = arith.constant 0 : i32
    %c0_i32_0 = arith.constant 0 : i32
    %c0_i32_1 = arith.constant 0 : i32
    return %c0_i32, %c0_i32_0 : i32, i32
  }
  func.func @transform_5(%arg0: i32) -> (i32, i32) {
    %c0_i32 = arith.constant 0 : i32
    %c0_i32_0 = arith.constant 0 : i32
    return %arg0, %c0_i32 : i32, i32
  }
}

</mosaic_0001>

<llo_original>
// kernel: tpu_custom_call.1
$region0: #{tpu_custom_call.1}
  #allocation0 [shape = 'u32[]', space=smem, size = 0x4, offset = 0x4, fixed_abs, tag = 'smem constant byte address 0x4 - core index']
  #allocation1 [shape = 'u32[144,128]{1,0:T(1,128)}', space=vmem, size = 0x12000, scoped, tag = 'internal scratch']
  %s0 = inlined_call_operand.hbm [shape: f32[16,32], index: 0, kind: input, shape index: {}]
  %s1 = inlined_call_operand.hbm [shape: f32[32,384], index: 1, kind: input, shape index: {}]
  %s2 = inlined_call_operand.vmem [shape: f32[1,384], index: 2, kind: input, shape index: {}]
  %s3 = inlined_call_operand.hbm [shape: f32[384,128], index: 3, kind: input, shape index: {}]
  %s4 = inlined_call_operand.vmem [shape: f32[1,128], index: 4, kind: input, shape index: {}]
  %s5 = inlined_call_operand.hbm [shape: f32[16,128], index: 5, kind: output, shape index: {}]
  %s6 = sld [smem:[#allocation0]]
  $region42: #{tpu_custom_call.1} parent=0
    _
  %s8 = ssub.s32 1, %s6
  %s9 = scalar_select 0, %s8, %s6
  $region1: #{tpu_custom_call.1} parent=0
    #allocation2 [shape = 'u8[8192]{0}', space=vmem, size = 0x2000, scoped, tag = 'input window, operand 0, single buffered']
    #allocation3 [shape = 's32[1]{0}', space=sflag, size = 0x4, scoped, tag = 'scoped memory for tpu_custom_call.1']
    #allocation4 [shape = 's32[1]{0}', space=sflag, size = 0x4, scoped, tag = 'scoped memory for tpu_custom_call.1']
    #allocation5 [shape = 'u8[49152]{0}', space=vmem, size = 0xc000, scoped, tag = 'input window, operand 1, single buffered']
    #allocation6 [shape = 's32[1]{0}', space=sflag, size = 0x4, scoped, tag = 'scoped memory for tpu_custom_call.1']
    #allocation7 [shape = 'u8[196608]{0}', space=vmem, size = 0x30000, scoped, tag = 'input window, operand 3, single buffered']
    #allocation8 [shape = 'u8[8192]{0}', space=vmem, size = 0x2000, scoped, tag = 'output window, operand 0, single buffered']
    %10 = vsyncpa [#allocation3], 0
    %11 = vsyncpa [#allocation6], 0
    %12 = vsyncpa [#allocation4], 0
    // Predicated region
    $region2: #{tpu_custom_call.1} parent=1 // pred_check
      _
    $region3: #{tpu_custom_call.1} parent=1 // pred_check_branch
      %14 = sbr.rel (0) target = $region5
    $region4: #{tpu_custom_call.1} parent=1 // pred_region
      %s16 = ssub.s32 256, 256
      %17 = vsyncadd [#allocation3], %s16
      %s18 = sshll.u32 [#allocation2], 4
      %s19 = int_to_ptr.vmem [resolvable:$true] %s18
      %24 = dma.hbm_to_vmem [thread:$0]  %s0, 256, %s19, [#allocation3], 128, 128, 8
    $region5: #{tpu_custom_call.1} parent=1 // pred_fallthru
      _
    // Predicated region
    $region6: #{tpu_custom_call.1} parent=1 // pred_check
      _
    $region7: #{tpu_custom_call.1} parent=1 // pred_check_branch
      %26 = sbr.rel (0) target = $region9
    $region8: #{tpu_custom_call.1} parent=1 // pred_region
      %s28 = ssub.s32 1536, 1536
      %29 = vsyncadd [#allocation6], %s28
      %s30 = sshll.u32 [#allocation5], 4
      %s31 = int_to_ptr.vmem [resolvable:$true] %s30
      %36 = dma.hbm_to_vmem [thread:$0]  %s1, 1536, %s31, [#allocation6], 384, 384, 24
    $region9: #{tpu_custom_call.1} parent=1 // pred_fallthru
      _
    // Predicated region
    $region10: #{tpu_custom_call.1} parent=1 // pred_check
      _
    $region11: #{tpu_custom_call.1} parent=1 // pred_check_branch
      %38 = sbr.rel (0) target = $region13
    $region12: #{tpu_custom_call.1} parent=1 // pred_region
      _
    $region13: #{tpu_custom_call.1} parent=1 // pred_fallthru
      _
    // Predicated region
    $region14: #{tpu_custom_call.1} parent=1 // pred_check
      _
    $region15: #{tpu_custom_call.1} parent=1 // pred_check_branch
      %40 = sbr.rel (0) target = $region17
    $region16: #{tpu_custom_call.1} parent=1 // pred_region
      %s42 = ssub.s32 6144, 6144
      %43 = vsyncadd [#allocation6], %s42
      %s44 = sshll.u32 [#allocation7], 4
      %s45 = int_to_ptr.vmem [resolvable:$true] %s44
      %50 = dma.hbm_to_vmem [thread:$0]  %s3, 6144, %s45, [#allocation6], 128, 128, 8
    $region17: #{tpu_custom_call.1} parent=1 // pred_fallthru
      _
    // Predicated region
    $region18: #{tpu_custom_call.1} parent=1 // pred_check
      _
    $region19: #{tpu_custom_call.1} parent=1 // pred_check_branch
      %52 = sbr.rel (0) target = $region21
    $region20: #{tpu_custom_call.1} parent=1 // pred_region
      _
    $region21: #{tpu_custom_call.1} parent=1 // pred_fallthru
      _
    // Predicated region
    $region22: #{tpu_custom_call.1} parent=1 // pred_check
      _
    $region23: #{tpu_custom_call.1} parent=1 // pred_check_branch
      %54 = sbr.rel (0) target = $region25
    $region24: #{tpu_custom_call.1} parent=1 // pred_region
      %55 = dma.done [#allocation3], 256
    $region25: #{tpu_custom_call.1} parent=1 // pred_fallthru
      _
    // Predicated region
    $region26: #{tpu_custom_call.1} parent=1 // pred_check
      _
    $region27: #{tpu_custom_call.1} parent=1 // pred_check_branch
      %57 = sbr.rel (0) target = $region29
    $region28: #{tpu_custom_call.1} parent=1 // pred_region
      %58 = dma.done [#allocation6], 1536
    $region29: #{tpu_custom_call.1} parent=1 // pred_fallthru
      _
    // Predicated region
    $region30: #{tpu_custom_call.1} parent=1 // pred_check
      _
    $region31: #{tpu_custom_call.1} parent=1 // pred_check_branch
      %60 = sbr.rel (0) target = $region33
    $region32: #{tpu_custom_call.1} parent=1 // pred_region
      %61 = dma.done [#allocation6], 6144
    $region33: #{tpu_custom_call.1} parent=1 // pred_fallthru
      _
    %v62 = vld [vmem:[#allocation2] sm:$0xff]
    %v63 = vld [vmem:[#allocation2 + $0x8] sm:$0xff]
    %v64 = vld [vmem:[#allocation5] sm:$0xff]
    %v65 = vld [vmem:[#allocation5 + $0x8] sm:$0xff]
    %v66 = vld [vmem:[#allocation5 + $0x10] sm:$0xff]
    %v67 = vld [vmem:[#allocation5 + $0x18] sm:$0xff]
    %v68 = vld [vmem:[#allocation5 + $0x20] sm:$0xff]
    %v69 = vld [vmem:[#allocation5 + $0x28] sm:$0xff]
    %v70 = vld [vmem:[#allocation5 + $0x30] sm:$0xff]
    %v71 = vld [vmem:[#allocation5 + $0x38] sm:$0xff]
    %v72 = vld [vmem:[#allocation5 + $0x40] sm:$0xff]
    %v73 = vld [vmem:[#allocation5 + $0x48] sm:$0xff]
    %v74 = vld [vmem:[#allocation5 + $0x50] sm:$0xff]
    %v75 = vld [vmem:[#allocation5 + $0x58] sm:$0xff]
    %v76 = vld [vmem:[%s2] sm:$0x7]
    %v78 = vlaneseq
    %v79 = vshrl.u32 %v78, 7
    %v80 = vsub.s32 0, %v79
    %v81 = vrot.slane %v76, %v80
    %v82 = vlaneseq
    %v83 = vshrl.u32 %v82, 7
    %v84 = vsub.s32 1, %v83
    %v85 = vrot.slane %v76, %v84
    %v86 = vlaneseq
    %v87 = vshrl.u32 %v86, 7
    %v88 = vsub.s32 2, %v87
    %v89 = vrot.slane %v76, %v88
    %vm93 = vcmask 261120
    %v95 = vsel %vm93, %v62, 0
    %v98 = vsel %vm93, %v63, 0
    %100 = vmatprep.subr.mxu0 %v65
    %101 = vmatpush1.msra.mxu0 %v64
    %102 = vmatprep.subr.mxu0 %v68
    %103 = vmatpush1.msra.mxu0 %v67
    %104 = vmatprep.subr.mxu0 %v71
    %105 = vmatpush1.msra.mxu0 %v70
    %106 = vmatprep.subr.mxu0 %v74
    %107 = vmatpush1.msra.mxu0 %v73
    %108 = vmatprep.subr.mxu0 0.0
    %109 = vmatpush1.msra.mxu0 0.0
    %110 = vmatprep.subr.mxu0 0.0
    %111 = vmatpush1.msra.mxu0 0.0
    %112 = vmatprep.subr.mxu0 0.0
    %113 = vmatpush1.msra.mxu0 0.0
    %114 = vmatprep.subr.mxu0 0.0
    %115 = vmatpush1.msra.mxu0 0.0
    %116 = vmatprep.subr.mxu0 0.0
    %117 = vmatpush1.msra.mxu0 0.0
    %118 = vmatprep.subr.mxu0 0.0
    %119 = vmatpush1.msra.mxu0 0.0
    %120 = vmatprep.subr.mxu0 0.0
    %121 = vmatpush1.msra.mxu0 0.0
    %122 = vmatprep.subr.mxu0 0.0
    %123 = vmatpush1.msra.mxu0 0.0
    %124 = vmatprep.subr.mxu0 0.0
    %125 = vmatpush1.msra.mxu0 0.0
    %126 = vmatprep.subr.mxu0 0.0
    %127 = vmatpush1.msra.mxu0 0.0
    %128 = vmatprep.subr.mxu0 0.0
    %129 = vmatpush1.msra.mxu0 0.0
    %130 = vmatprep.subr.mxu0 0.0
    %131 = vmatpush1.msra.mxu0 0.0
    %132 = vmatprep.subr.mxu0 0.0
    %133 = vmatpush1.msra.mxu0 0.0
    %134 = vmatprep.subr.mxu0 0.0
    %135 = vmatpush1.msra.mxu0 0.0
    %136 = vmatprep.subr.mxu0 0.0
    %137 = vmatpush1.msra.mxu0 0.0
    %138 = vmatprep.subr.mxu0 0.0
    %139 = vmatpush1.msra.mxu0 0.0
    %140 = vmatprep.subr.mxu0 0.0
    %141 = vmatpush1.msra.mxu0 0.0
    %142 = vmatprep.subr.mxu0 0.0
    %143 = vmatpush1.msra.mxu0 0.0
    %144 = vmatprep.subr.mxu0 0.0
    %145 = vmatpush1.msra.mxu0 0.0
    %146 = vmatprep.subr.mxu0 0.0
    %147 = vmatpush1.msra.mxu0 0.0
    %148 = vmatprep.subr.mxu0 0.0
    %149 = vmatpush1.msra.mxu0 0.0
    %150 = vmatprep.subr.mxu0 0.0
    %151 = vmatpush1.msra.mxu0 0.0
    %152 = vmatprep.subr.mxu0 0.0
    %153 = vmatpush1.msra.mxu0 0.0
    %154 = vmatprep.subr.mxu0 0.0
    %155 = vmatpush1.msra.mxu0 0.0
    %156 = vmatprep.subr.mxu0 0.0
    %157 = vmatpush1.msra.mxu0 0.0
    %158 = vmatprep.subr.mxu0 0.0
    %159 = vmatpush1.msra.mxu0 0.0
    %160 = vmatprep.subr.mxu0 0.0
    %161 = vmatpush1.msra.mxu0 0.0
    %162 = vmatprep.subr.mxu0 0.0
    %163 = vmatpush1.msra.mxu0 0.0
    %164 = vmatprep.mubr.f32.mxu0 0.0
    %165 = vmatmul.mubr.f32.gmra.mrb[0].mxu0 %v95
    %v166 = vpop.f32.mrb[0].mxu0
    %v167 = vadd.f32 %v81, %v166
    %v168 = vpop.f32.mrb[0].mxu0
    %v169 = vadd.f32 %v85, %v168
    %170 = vmatprep.mubr.f32.mxu0 0.0
    %171 = vmatmul.mubr.f32.gmra.mrb[0].mxu0 %v98
    %v172 = vpop.f32.mrb[0].mxu0
    %v173 = vadd.f32 %v81, %v172
    %v174 = vpop.f32.mrb[0].mxu0
    %v175 = vadd.f32 %v85, %v174
    %176 = vdwg.mxu0
    %177 = vmatprep.subr.mxu0 0.0
    %178 = vmatpush1.msra.mxu0 %v66
    %179 = vmatprep.subr.mxu0 0.0
    %180 = vmatpush1.msra.mxu0 %v69
    %181 = vmatprep.subr.mxu0 0.0
    %182 = vmatpush1.msra.mxu0 %v72
    %183 = vmatprep.subr.mxu0 0.0
    %184 = vmatpush1.msra.mxu0 %v75
    %185 = vmatprep.subr.mxu0 0.0
    %186 = vmatpush1.msra.mxu0 0.0
    %187 = vmatprep.subr.mxu0 0.0
    %188 = vmatpush1.msra.mxu0 0.0
    %189 = vmatprep.subr.mxu0 0.0
    %190 = vmatpush1.msra.mxu0 0.0
    %191 = vmatprep.subr.mxu0 0.0
    %192 = vmatpush1.msra.mxu0 0.0
    %193 = vmatprep.subr.mxu0 0.0
    %194 = vmatpush1.msra.mxu0 0.0
    %195 = vmatprep.subr.mxu0 0.0
    %196 = vmatpush1.msra.mxu0 0.0
    %197 = vmatprep.subr.mxu0 0.0
    %198 = vmatpush1.msra.mxu0 0.0
    %199 = vmatprep.subr.mxu0 0.0
    %200 = vmatpush1.msra.mxu0 0.0
    %201 = vmatprep.subr.mxu0 0.0
    %202 = vmatpush1.msra.mxu0 0.0
    %203 = vmatprep.subr.mxu0 0.0
    %204 = vmatpush1.msra.mxu0 0.0
    %205 = vmatprep.subr.mxu0 0.0
    %206 = vmatpush1.msra.mxu0 0.0
    %207 = vmatprep.subr.mxu0 0.0
    %208 = vmatpush1.msra.mxu0 0.0
    %209 = vmatprep.subr.mxu0 0.0
    %210 = vmatpush1.msra.mxu0 0.0
    %211 = vmatprep.subr.mxu0 0.0
    %212 = vmatpush1.msra.mxu0 0.0
    %213 = vmatprep.subr.mxu0 0.0
    %214 = vmatpush1.msra.mxu0 0.0
    %215 = vmatprep.subr.mxu0 0.0
    %216 = vmatpush1.msra.mxu0 0.0
    %217 = vmatprep.subr.mxu0 0.0
    %218 = vmatpush1.msra.mxu0 0.0
    %219 = vmatprep.subr.mxu0 0.0
    %220 = vmatpush1.msra.mxu0 0.0
    %221 = vmatprep.subr.mxu0 0.0
    %222 = vmatpush1.msra.mxu0 0.0
    %223 = vmatprep.subr.mxu0 0.0
    %224 = vmatpush1.msra.mxu0 0.0
    %225 = vmatprep.subr.mxu0 0.0
    %226 = vmatpush1.msra.mxu0 0.0
    %227 = vmatprep.subr.mxu0 0.0
    %228 = vmatpush1.msra.mxu0 0.0
    %229 = vmatprep.subr.mxu0 0.0
    %230 = vmatpush1.msra.mxu0 0.0
    %231 = vmatprep.subr.mxu0 0.0
    %232 = vmatpush1.msra.mxu0 0.0
    %233 = vmatprep.subr.mxu0 0.0
    %234 = vmatpush1.msra.mxu0 0.0
    %235 = vmatprep.subr.mxu0 0.0
    %236 = vmatpush1.msra.mxu0 0.0
    %237 = vmatprep.subr.mxu0 0.0
    %238 = vmatpush1.msra.mxu0 0.0
    %239 = vmatprep.subr.mxu0 0.0
    %240 = vmatpush1.msra.mxu0 0.0
    %241 = vmatprep.mubr.f32.mxu0 0.0
    %242 = vmatmul.mubr.f32.gmra.mrb[0].mxu0 %v95
    %v243 = vpop.f32.mrb[0].mxu0
    %v244 = vadd.f32 %v89, %v243
    %v245 = vpop.f32.mrb[0].mxu0
    %246 = vmatprep.mubr.f32.mxu0 0.0
    %247 = vmatmul.mubr.f32.gmra.mrb[0].mxu0 %v98
    %v248 = vpop.f32.mrb[0].mxu0
    %v249 = vadd.f32 %v89, %v248
    %v250 = vpop.f32.mrb[0].mxu0
    %251 = vdwg.mxu0
    %v252 = vld [vmem:[#allocation7] sm:$0xff]
    %v253 = vld [vmem:[#allocation7 + $0x8] sm:$0xff]
    %v254 = vld [vmem:[#allocation7 + $0x10] sm:$0xff]
    %v255 = vld [vmem:[#allocation7 + $0x18] sm:$0xff]
    %v256 = vld [vmem:[#allocation7 + $0x20] sm:$0xff]
    %v257 = vld [vmem:[#allocation7 + $0x28] sm:$0xff]
    %v258 = vld [vmem:[#allocation7 + $0x30] sm:$0xff]
    %v259 = vld [vmem:[#allocation7 + $0x38] sm:$0xff]
    %v260 = vld [vmem:[#allocation7 + $0x40] sm:$0xff]
    %v261 = vld [vmem:[#allocation7 + $0x48] sm:$0xff]
    %v262 = vld [vmem:[#allocation7 + $0x50] sm:$0xff]
    %v263 = vld [vmem:[#allocation7 + $0x58] sm:$0xff]
    %v264 = vld [vmem:[#allocation7 + $0x60] sm:$0xff]
    %v265 = vld [vmem:[#allocation7 + $0x68] sm:$0xff]
    %v266 = vld [vmem:[#allocation7 + $0x70] sm:$0xff]
    %v267 = vld [vmem:[#allocation7 + $0x78] sm:$0xff]
    %v268 = vld [vmem:[#allocation7 + $0x80] sm:$0xff]
    %v269 = vld [vmem:[#allocation7 + $0x88] sm:$0xff]
    %v270 = vld [vmem:[#allocation7 + $0x90] sm:$0xff]
    %v271 = vld [vmem:[#allocation7 + $0x98] sm:$0xff]
    %v272 = vld [vmem:[#allocation7 + $0xa0] sm:$0xff]
    %v273 = vld [vmem:[#allocation7 + $0xa8] sm:$0xff]
    %v274 = vld [vmem:[#allocation7 + $0xb0] sm:$0xff]
    %v275 = vld [vmem:[#allocation7 + $0xb8] sm:$0xff]
    %v276 = vld [vmem:[#allocation7 + $0xc0] sm:$0xff]
    %v277 = vld [vmem:[#allocation7 + $0xc8] sm:$0xff]
    %v278 = vld [vmem:[#allocation7 + $0xd0] sm:$0xff]
    %v279 = vld [vmem:[#allocation7 + $0xd8] sm:$0xff]
    %v280 = vld [vmem:[#allocation7 + $0xe0] sm:$0xff]
    %v281 = vld [vmem:[#allocation7 + $0xe8] sm:$0xff]
    %v282 = vld [vmem:[#allocation7 + $0xf0] sm:$0xff]
    %v283 = vld [vmem:[#allocation7 + $0xf8] sm:$0xff]
    %v284 = vld [vmem:[#allocation7 + $0x100] sm:$0xff]
    %v285 = vld [vmem:[#allocation7 + $0x108] sm:$0xff]
    %v286 = vld [vmem:[#allocation7 + $0x110] sm:$0xff]
    %v287 = vld [vmem:[#allocation7 + $0x118] sm:$0xff]
    %v288 = vld [vmem:[#allocation7 + $0x120] sm:$0xff]
    %v289 = vld [vmem:[#allocation7 + $0x128] sm:$0xff]
    %v290 = vld [vmem:[#allocation7 + $0x130] sm:$0xff]
    %v291 = vld [vmem:[#allocation7 + $0x138] sm:$0xff]
    %v292 = vld [vmem:[#allocation7 + $0x140] sm:$0xff]
    %v293 = vld [vmem:[#allocation7 + $0x148] sm:$0xff]
    %v294 = vld [vmem:[#allocation7 + $0x150] sm:$0xff]
    %v295 = vld [vmem:[#allocation7 + $0x158] sm:$0xff]
    %v296 = vld [vmem:[#allocation7 + $0x160] sm:$0xff]
    %v297 = vld [vmem:[#allocation7 + $0x168] sm:$0xff]
    %v298 = vld [vmem:[#allocation7 + $0x170] sm:$0xff]
    %v299 = vld [vmem:[#allocation7 + $0x178] sm:$0xff]
    %v300 = vld [vmem:[%s4] sm:$0x1]
    %v302 = vlaneseq
    %v303 = vshrl.u32 %v302, 7
    %v304 = vsub.s32 0, %v303
    %v305 = vrot.slane %v300, %v304
    %307 = vmatprep.subr.mxu0 0.0
    %308 = vmatpush1.msra.mxu0 %v252
    %309 = vmatprep.subr.mxu0 0.0
    %310 = vmatpush1.msra.mxu0 %v253
    %311 = vmatprep.subr.mxu0 0.0
    %312 = vmatpush1.msra.mxu0 %v254
    %313 = vmatprep.subr.mxu0 0.0
    %314 = vmatpush1.msra.mxu0 %v255
    %315 = vmatprep.subr.mxu0 0.0
    %316 = vmatpush1.msra.mxu0 %v256
    %317 = vmatprep.subr.mxu0 0.0
    %318 = vmatpush1.msra.mxu0 %v257
    %319 = vmatprep.subr.mxu0 0.0
    %320 = vmatpush1.msra.mxu0 %v258
    %321 = vmatprep.subr.mxu0 0.0
    %322 = vmatpush1.msra.mxu0 %v259
    %323 = vmatprep.subr.mxu0 0.0
    %324 = vmatpush1.msra.mxu0 %v260
    %325 = vmatprep.subr.mxu0 0.0
    %326 = vmatpush1.msra.mxu0 %v261
    %327 = vmatprep.subr.mxu0 0.0
    %328 = vmatpush1.msra.mxu0 %v262
    %329 = vmatprep.subr.mxu0 0.0
    %330 = vmatpush1.msra.mxu0 %v263
    %331 = vmatprep.subr.mxu0 0.0
    %332 = vmatpush1.msra.mxu0 %v264
    %333 = vmatprep.subr.mxu0 0.0
    %334 = vmatpush1.msra.mxu0 %v265
    %335 = vmatprep.subr.mxu0 0.0
    %336 = vmatpush1.msra.mxu0 %v266
    %337 = vmatprep.subr.mxu0 0.0
    %338 = vmatpush1.msra.mxu0 %v267
    %339 = vmatprep.subr.mxu0 0.0
    %340 = vmatpush1.msra.mxu0 %v268
    %341 = vmatprep.subr.mxu0 0.0
    %342 = vmatpush1.msra.mxu0 %v269
    %343 = vmatprep.subr.mxu0 0.0
    %344 = vmatpush1.msra.mxu0 %v270
    %345 = vmatprep.subr.mxu0 0.0
    %346 = vmatpush1.msra.mxu0 %v271
    %347 = vmatprep.subr.mxu0 0.0
    %348 = vmatpush1.msra.mxu0 %v272
    %349 = vmatprep.subr.mxu0 0.0
    %350 = vmatpush1.msra.mxu0 %v273
    %351 = vmatprep.subr.mxu0 0.0
    %352 = vmatpush1.msra.mxu0 %v274
    %353 = vmatprep.subr.mxu0 0.0
    %354 = vmatpush1.msra.mxu0 %v275
    %355 = vmatprep.subr.mxu0 0.0
    %356 = vmatpush1.msra.mxu0 %v276
    %357 = vmatprep.subr.mxu0 0.0
    %358 = vmatpush1.msra.mxu0 %v277
    %359 = vmatprep.subr.mxu0 0.0
    %360 = vmatpush1.msra.mxu0 %v278
    %361 = vmatprep.subr.mxu0 0.0
    %362 = vmatpush1.msra.mxu0 %v279
    %363 = vmatprep.subr.mxu0 0.0
    %364 = vmatpush1.msra.mxu0 %v280
    %365 = vmatprep.subr.mxu0 0.0
    %366 = vmatpush1.msra.mxu0 %v281
    %367 = vmatprep.subr.mxu0 0.0
    %368 = vmatpush1.msra.mxu0 %v282
    %369 = vmatprep.subr.mxu0 0.0
    %370 = vmatpush1.msra.mxu0 %v283
    %371 = vmatprep.mubr.f32.mxu0 %v169
    %372 = vmatmul.mubr.f32.gmra.mrb[0].mxu0 %v167
    %v373 = vpop.f32.mrb[0].mxu0
    %v374 = vadd.f32 %v305, %v373
    %v375 = vpop.f32.mrb[0].mxu0
    %376 = vmatprep.mubr.f32.mxu0 %v175
    %377 = vmatmul.mubr.f32.gmra.mrb[0].mxu0 %v173
    %v378 = vpop.f32.mrb[0].mxu0
    %v379 = vadd.f32 %v305, %v378
    %v380 = vpop.f32.mrb[0].mxu0
    %381 = vdwg.mxu0
    %382 = vmatprep.subr.mxu0 0.0
    %383 = vmatpush1.msra.mxu0 %v284
    %384 = vmatprep.subr.mxu0 0.0
    %385 = vmatpush1.msra.mxu0 %v285
    %386 = vmatprep.subr.mxu0 0.0
    %387 = vmatpush1.msra.mxu0 %v286
    %388 = vmatprep.subr.mxu0 0.0
    %389 = vmatpush1.msra.mxu0 %v287
    %390 = vmatprep.subr.mxu0 0.0
    %391 = vmatpush1.msra.mxu0 %v288
    %392 = vmatprep.subr.mxu0 0.0
    %393 = vmatpush1.msra.mxu0 %v289
    %394 = vmatprep.subr.mxu0 0.0
    %395 = vmatpush1.msra.mxu0 %v290
    %396 = vmatprep.subr.mxu0 0.0
    %397 = vmatpush1.msra.mxu0 %v291
    %398 = vmatprep.subr.mxu0 0.0
    %399 = vmatpush1.msra.mxu0 %v292
    %400 = vmatprep.subr.mxu0 0.0
    %401 = vmatpush1.msra.mxu0 %v293
    %402 = vmatprep.subr.mxu0 0.0
    %403 = vmatpush1.msra.mxu0 %v294
    %404 = vmatprep.subr.mxu0 0.0
    %405 = vmatpush1.msra.mxu0 %v295
    %406 = vmatprep.subr.mxu0 0.0
    %407 = vmatpush1.msra.mxu0 %v296
    %408 = vmatprep.subr.mxu0 0.0
    %409 = vmatpush1.msra.mxu0 %v297
    %410 = vmatprep.subr.mxu0 0.0
    %411 = vmatpush1.msra.mxu0 %v298
    %412 = vmatprep.subr.mxu0 0.0
    %413 = vmatpush1.msra.mxu0 %v299
    %414 = vmatprep.subr.mxu0 0.0
    %415 = vmatpush1.msra.mxu0 0.0
    %416 = vmatprep.subr.mxu0 0.0
    %417 = vmatpush1.msra.mxu0 0.0
    %418 = vmatprep.subr.mxu0 0.0
    %419 = vmatpush1.msra.mxu0 0.0
    %420 = vmatprep.subr.mxu0 0.0
    %421 = vmatpush1.msra.mxu0 0.0
    %422 = vmatprep.subr.mxu0 0.0
    %423 = vmatpush1.msra.mxu0 0.0
    %424 = vmatprep.subr.mxu0 0.0
    %425 = vmatpush1.msra.mxu0 0.0
    %426 = vmatprep.subr.mxu0 0.0
    %427 = vmatpush1.msra.mxu0 0.0
    %428 = vmatprep.subr.mxu0 0.0
    %429 = vmatpush1.msra.mxu0 0.0
    %430 = vmatprep.subr.mxu0 0.0
    %431 = vmatpush1.msra.mxu0 0.0
    %432 = vmatprep.subr.mxu0 0.0
    %433 = vmatpush1.msra.mxu0 0.0
    %434 = vmatprep.subr.mxu0 0.0
    %435 = vmatpush1.msra.mxu0 0.0
    %436 = vmatprep.subr.mxu0 0.0
    %437 = vmatpush1.msra.mxu0 0.0
    %438 = vmatprep.subr.mxu0 0.0
    %439 = vmatpush1.msra.mxu0 0.0
    %440 = vmatprep.subr.mxu0 0.0
    %441 = vmatpush1.msra.mxu0 0.0
    %442 = vmatprep.subr.mxu0 0.0
    %443 = vmatpush1.msra.mxu0 0.0
    %444 = vmatprep.subr.mxu0 0.0
    %445 = vmatpush1.msra.mxu0 0.0
    %446 = vmatprep.mubr.f32.mxu0 0.0
    %447 = vmatmul.mubr.f32.gmra.mrb[0].mxu0 %v244
    %v448 = vpop.f32.mrb[0].mxu0
    %v449 = vadd.f32 %v374, %v448
    %v450 = vpop.f32.mrb[0].mxu0
    %451 = vmatprep.mubr.f32.mxu0 0.0
    %452 = vmatmul.mubr.f32.gmra.mrb[0].mxu0 %v249
    %v453 = vpop.f32.mrb[0].mxu0
    %v454 = vadd.f32 %v379, %v453
    %v455 = vpop.f32.mrb[0].mxu0
    %456 = vdwg.mxu0
    %457 = vmax.xlane.f32.xlu0 %v449
    %v458 = vpop.xlane.xlu0 %457
    %459 = vmax.xlane.f32.xlu0 %v454
    %v460 = vpop.xlane.xlu0 %459
    %v461 = vsub.f32 %v449, %v458
    %v462 = vsub.f32 %v454, %v460
    %v463 = vmul.f32 %v461, 1.442695
    %v464 = vpow.pop %v463
    %v465 = vmul.f32 %v462, 1.442695
    %v466 = vpow.pop %v465
    %467 = vadd.xlane.f32.xlu0 %v464
    %v468 = vpop.xlane.xlu0 %467
    %469 = vadd.xlane.f32.xlu0 %v466
    %v470 = vpop.xlane.xlu0 %469
    %v471 = vlog2.pop %v468
    %v472 = vmul.f32 %v471, 0.6931472
    %v473 = vlog2.pop %v470
    %v474 = vmul.f32 %v473, 0.6931472
    %v475 = vsub.f32 %v461, %v472
    %v476 = vsub.f32 %v462, %v474
    %477 = vst [vmem:[#allocation8] sm:$0xff] %v475
    %478 = vst [vmem:[#allocation8 + $0x8] sm:$0xff] %v476
    // Predicated region
    $region34: #{tpu_custom_call.1} parent=1 // pred_check
      _
    $region35: #{tpu_custom_call.1} parent=1 // pred_check_branch
      %480 = sbr.rel (0) target = $region37
    $region36: #{tpu_custom_call.1} parent=1 // pred_region
      %s482 = ssub.s32 256, 256
      %483 = vsyncadd [#allocation4], %s482
      %s484 = sshll.u32 [#allocation8], 4
      %s485 = int_to_ptr.vmem [resolvable:$true] %s484
      %490 = dma.vmem_to_hbm [thread:$0]  %s485, 256, %s5, [#allocation4], 128, 128, 8
    $region37: #{tpu_custom_call.1} parent=1 // pred_fallthru
      _
    // Predicated region
    $region38: #{tpu_custom_call.1} parent=1 // pred_check
      _
    $region39: #{tpu_custom_call.1} parent=1 // pred_check_branch
      %492 = sbr.rel (0) target = $region41
    $region40: #{tpu_custom_call.1} parent=1 // pred_region
      %493 = dma.done [#allocation4], 256
    $region41: #{tpu_custom_call.1} parent=1 // pred_fallthru
      _
    %494 = vsyncpa [#allocation3], 1
    %495 = vsyncpa [#allocation6], 1
    %496 = vsyncpa [#allocation4], 1

// kernel: tpu_custom_call.1
$region0: #{tpu_custom_call.1}
  #allocation0 [shape = 'u32[]', space=smem, size = 0x4, offset = 0x4, fixed_abs, tag = 'smem constant byte address 0x4 - core index']
  #allocation1 [shape = 'u32[144,128]{1,0:T(1,128)}', space=vmem, size = 0x12000, scoped, tag = 'internal scratch']
  %s0 = inlined_call_operand.hbm [shape: f32[16,32], index: 0, kind: input, shape index: {}]
  %s1 = inlined_call_operand.hbm [shape: f32[32,384], index: 1, kind: input, shape index: {}]
  %s2 = inlined_call_operand.vmem [shape: f32[1,384], index: 2, kind: input, shape index: {}]
  %s3 = inlined_call_operand.hbm [shape: f32[384,128], index: 3, kind: input, shape index: {}]
  %s4 = inlined_call_operand.vmem [shape: f32[1,128], index: 4, kind: input, shape index: {}]
  %s5 = inlined_call_operand.hbm [shape: f32[16,128], index: 5, kind: output, shape index: {}]
  %s6 = sld [smem:[#allocation0]]
  $region42: #{tpu_custom_call.1} parent=0
    _
  %s8 = ssub.s32 1, %s6
  %s9 = scalar_select 0, %s8, %s6
  $region1: #{tpu_custom_call.1} parent=0
    #allocation2 [shape = 'u8[8192]{0}', space=vmem, size = 0x2000, scoped, tag = 'input window, operand 0, single buffered']
    #allocation3 [shape = 's32[1]{0}', space=sflag, size = 0x4, scoped, tag = 'scoped memory for tpu_custom_call.1']
    #allocation4 [shape = 's32[1]{0}', space=sflag, size = 0x4, scoped, tag = 'scoped memory for tpu_custom_call.1']
    #allocation5 [shape = 'u8[49152]{0}', space=vmem, size = 0xc000, scoped, tag = 'input window, operand 1, single buffered']
    #allocation6 [shape = 's32[1]{0}', space=sflag, size = 0x4, scoped, tag = 'scoped memory for tpu_custom_call.1']
    #allocation7 [shape = 'u8[196608]{0}', space=vmem, size = 0x30000, scoped, tag = 'input window, operand 3, single buffered']
    #allocation8 [shape = 'u8[8192]{0}', space=vmem, size = 0x2000, scoped, tag = 'output window, operand 0, single buffered']
    %10 = vsyncpa [#allocation3], 0
    %11 = vsyncpa [#allocation6], 0
    %12 = vsyncpa [#allocation4], 0
    // Predicated region
    $region2: #{tpu_custom_call.1} parent=1 // pred_check
      _
    $region3: #{tpu_custom_call.1} parent=1 // pred_check_branch
      %14 = sbr.rel (0) target = $region5
    $region4: #{tpu_custom_call.1} parent=1 // pred_region
      %s16 = ssub.s32 256, 256
      %17 = vsyncadd [#allocation3], %s16
      %s18 = sshll.u32 [#allocation2], 4
      %s19 = int_to_ptr.vmem [resolvable:$true] %s18
      %24 = dma.hbm_to_vmem [thread:$0]  %s0, 256, %s19, [#allocation3], 128, 128, 8
    $region5: #{tpu_custom_call.1} parent=1 // pred_fallthru
      _
    // Predicated region
    $region6: #{tpu_custom_call.1} parent=1 // pred_check
      _
    $region7: #{tpu_custom_call.1} parent=1 // pred_check_branch
      %26 = sbr.rel (0) target = $region9
    $region8: #{tpu_custom_call.1} parent=1 // pred_region
      %s28 = ssub.s32 1536, 1536
      %29 = vsyncadd [#allocation6], %s28
      %s30 = sshll.u32 [#allocation5], 4
      %s31 = int_to_ptr.vmem [resolvable:$true] %s30
      %36 = dma.hbm_to_vmem [thread:$0]  %s1, 1536, %s31, [#allocation6], 384, 384, 24
    $region9: #{tpu_custom_call.1} parent=1 // pred_fallthru
      _
    // Predicated region
    $region10: #{tpu_custom_call.1} parent=1 // pred_check
      _
    $region11: #{tpu_custom_call.1} parent=1 // pred_check_branch
      %38 = sbr.rel (0) target = $region13
    $region12: #{tpu_custom_call.1} parent=1 // pred_region
      _
    $region13: #{tpu_custom_call.1} parent=1 // pred_fallthru
      _
    // Predicated region
    $region14: #{tpu_custom_call.1} parent=1 // pred_check
      _
    $region15: #{tpu_custom_call.1} parent=1 // pred_check_branch
      %40 = sbr.rel (0) target = $region17
    $region16: #{tpu_custom_call.1} parent=1 // pred_region
      %s42 = ssub.s32 6144, 6144
      %43 = vsyncadd [#allocation6], %s42
      %s44 = sshll.u32 [#allocation7], 4
      %s45 = int_to_ptr.vmem [resolvable:$true] %s44
      %50 = dma.hbm_to_vmem [thread:$0]  %s3, 6144, %s45, [#allocation6], 128, 128, 8
    $region17: #{tpu_custom_call.1} parent=1 // pred_fallthru
      _
    // Predicated region
    $region18: #{tpu_custom_call.1} parent=1 // pred_check
      _
    $region19: #{tpu_custom_call.1} parent=1 // pred_check_branch
      %52 = sbr.rel (0) target = $region21
    $region20: #{tpu_custom_call.1} parent=1 // pred_region
      _
    $region21: #{tpu_custom_call.1} parent=1 // pred_fallthru
      _
    // Predicated region
    $region22: #{tpu_custom_call.1} parent=1 // pred_check
      _
    $region23: #{tpu_custom_call.1} parent=1 // pred_check_branch
      %54 = sbr.rel (0) target = $region25
    $region24: #{tpu_custom_call.1} parent=1 // pred_region
      %55 = dma.done [#allocation3], 256
    $region25: #{tpu_custom_call.1} parent=1 // pred_fallthru
      _
    // Predicated region
    $region26: #{tpu_custom_call.1} parent=1 // pred_check
      _
    $region27: #{tpu_custom_call.1} parent=1 // pred_check_branch
      %57 = sbr.rel (0) target = $region29
    $region28: #{tpu_custom_call.1} parent=1 // pred_region
      %58 = dma.done [#allocation6], 1536
    $region29: #{tpu_custom_call.1} parent=1 // pred_fallthru
      _
    // Predicated region
    $region30: #{tpu_custom_call.1} parent=1 // pred_check
      _
    $region31: #{tpu_custom_call.1} parent=1 // pred_check_branch
      %60 = sbr.rel (0) target = $region33
    $region32: #{tpu_custom_call.1} parent=1 // pred_region
      %61 = dma.done [#allocation6], 6144
    $region33: #{tpu_custom_call.1} parent=1 // pred_fallthru
      _
    %v62 = vld [vmem:[#allocation2] sm:$0xff]
    %v63 = vld [vmem:[#allocation2 + $0x8] sm:$0xff]
    %v64 = vld [vmem:[#allocation5] sm:$0xff]
    %v65 = vld [vmem:[#allocation5 + $0x8] sm:$0xff]
    %v66 = vld [vmem:[#allocation5 + $0x10] sm:$0xff]
    %v67 = vld [vmem:[#allocation5 + $0x18] sm:$0xff]
    %v68 = vld [vmem:[#allocation5 + $0x20] sm:$0xff]
    %v69 = vld [vmem:[#allocation5 + $0x28] sm:$0xff]
    %v70 = vld [vmem:[#allocation5 + $0x30] sm:$0xff]
    %v71 = vld [vmem:[#allocation5 + $0x38] sm:$0xff]
    %v72 = vld [vmem:[#allocation5 + $0x40] sm:$0xff]
    %v73 = vld [vmem:[#allocation5 + $0x48] sm:$0xff]
    %v74 = vld [vmem:[#allocation5 + $0x50] sm:$0xff]
    %v75 = vld [vmem:[#allocation5 + $0x58] sm:$0xff]
    %v76 = vld [vmem:[%s2] sm:$0x7]
    %v78 = vlaneseq
    %v79 = vshrl.u32 %v78, 7
    %v80 = vsub.s32 0, %v79
    %v81 = vrot.slane %v76, %v80
    %v82 = vlaneseq
    %v83 = vshrl.u32 %v82, 7
    %v84 = vsub.s32 1, %v83
    %v85 = vrot.slane %v76, %v84
    %v86 = vlaneseq
    %v87 = vshrl.u32 %v86, 7
    %v88 = vsub.s32 2, %v87
    %v89 = vrot.slane %v76, %v88
    %vm93 = vcmask 261120
    %v95 = vsel %vm93, %v62, 0
    %v98 = vsel %vm93, %v63, 0
    %100 = vmatprep.subr.mxu0 %v65
    %101 = vmatpush1.msra.mxu0 %v64
    %102 = vmatprep.subr.mxu0 %v68
    %103 = vmatpush1.msra.mxu0 %v67
    %104 = vmatprep.subr.mxu0 %v71
    %105 = vmatpush1.msra.mxu0 %v70
    %106 = vmatprep.subr.mxu0 %v74
    %107 = vmatpush1.msra.mxu0 %v73
    %108 = vmatprep.subr.mxu0 0.0
    %109 = vmatpush1.msra.mxu0 0.0
    %110 = vmatprep.subr.mxu0 0.0
    %111 = vmatpush1.msra.mxu0 0.0
    %112 = vmatprep.subr.mxu0 0.0
    %113 = vmatpush1.msra.mxu0 0.0
    %114 = vmatprep.subr.mxu0 0.0
    %115 = vmatpush1.msra.mxu0 0.0
    %116 = vmatprep.subr.mxu0 0.0
    %117 = vmatpush1.msra.mxu0 0.0
    %118 = vmatprep.subr.mxu0 0.0
    %119 = vmatpush1.msra.mxu0 0.0
    %120 = vmatprep.subr.mxu0 0.0
    %121 = vmatpush1.msra.mxu0 0.0
    %122 = vmatprep.subr.mxu0 0.0
    %123 = vmatpush1.msra.mxu0 0.0
    %124 = vmatprep.subr.mxu0 0.0
    %125 = vmatpush1.msra.mxu0 0.0
    %126 = vmatprep.subr.mxu0 0.0
    %127 = vmatpush1.msra.mxu0 0.0
    %128 = vmatprep.subr.mxu0 0.0
    %129 = vmatpush1.msra.mxu0 0.0
    %130 = vmatprep.subr.mxu0 0.0
    %131 = vmatpush1.msra.mxu0 0.0
    %132 = vmatprep.subr.mxu0 0.0
    %133 = vmatpush1.msra.mxu0 0.0
    %134 = vmatprep.subr.mxu0 0.0
    %135 = vmatpush1.msra.mxu0 0.0
    %136 = vmatprep.subr.mxu0 0.0
    %137 = vmatpush1.msra.mxu0 0.0
    %138 = vmatprep.subr.mxu0 0.0
    %139 = vmatpush1.msra.mxu0 0.0
    %140 = vmatprep.subr.mxu0 0.0
    %141 = vmatpush1.msra.mxu0 0.0
    %142 = vmatprep.subr.mxu0 0.0
    %143 = vmatpush1.msra.mxu0 0.0
    %144 = vmatprep.subr.mxu0 0.0
    %145 = vmatpush1.msra.mxu0 0.0
    %146 = vmatprep.subr.mxu0 0.0
    %147 = vmatpush1.msra.mxu0 0.0
    %148 = vmatprep.subr.mxu0 0.0
    %149 = vmatpush1.msra.mxu0 0.0
    %150 = vmatprep.subr.mxu0 0.0
    %151 = vmatpush1.msra.mxu0 0.0
    %152 = vmatprep.subr.mxu0 0.0
    %153 = vmatpush1.msra.mxu0 0.0
    %154 = vmatprep.subr.mxu0 0.0
    %155 = vmatpush1.msra.mxu0 0.0
    %156 = vmatprep.subr.mxu0 0.0
    %157 = vmatpush1.msra.mxu0 0.0
    %158 = vmatprep.subr.mxu0 0.0
    %159 = vmatpush1.msra.mxu0 0.0
    %160 = vmatprep.subr.mxu0 0.0
    %161 = vmatpush1.msra.mxu0 0.0
    %162 = vmatprep.subr.mxu0 0.0
    %163 = vmatpush1.msra.mxu0 0.0
    %164 = vmatprep.mubr.f32.mxu0 0.0
    %165 = vmatmul.mubr.f32.gmra.mrb[0].mxu0 %v95
    %v166 = vpop.f32.mrb[0].mxu0
    %v167 = vadd.f32 %v81, %v166
    %v168 = vpop.f32.mrb[0].mxu0
    %v169 = vadd.f32 %v85, %v168
    %170 = vmatprep.mubr.f32.mxu0 0.0
    %171 = vmatmul.mubr.f32.gmra.mrb[0].mxu0 %v98
    %v172 = vpop.f32.mrb[0].mxu0
    %v173 = vadd.f32 %v81, %v172
    %v174 = vpop.f32.mrb[0].mxu0
    %v175 = vadd.f32 %v85, %v174
    %176 = vdwg.mxu0
    %177 = vmatprep.subr.mxu0 0.0
    %178 = vmatpush1.msra.mxu0 %v66
    %179 = vmatprep.subr.mxu0 0.0
    %180 = vmatpush1.msra.mxu0 %v69
    %181 = vmatprep.subr.mxu0 0.0
    %182 = vmatpush1.msra.mxu0 %v72
    %183 = vmatprep.subr.mxu0 0.0
    %184 = vmatpush1.msra.mxu0 %v75
    %185 = vmatprep.subr.mxu0 0.0
    %186 = vmatpush1.msra.mxu0 0.0
    %187 = vmatprep.subr.mxu0 0.0
    %188 = vmatpush1.msra.mxu0 0.0
    %189 = vmatprep.subr.mxu0 0.0
    %190 = vmatpush1.msra.mxu0 0.0
    %191 = vmatprep.subr.mxu0 0.0
    %192 = vmatpush1.msra.mxu0 0.0
    %193 = vmatprep.subr.mxu0 0.0
    %194 = vmatpush1.msra.mxu0 0.0
    %195 = vmatprep.subr.mxu0 0.0
    %196 = vmatpush1.msra.mxu0 0.0
    %197 = vmatprep.subr.mxu0 0.0
    %198 = vmatpush1.msra.mxu0 0.0
    %199 = vmatprep.subr.mxu0 0.0
    %200 = vmatpush1.msra.mxu0 0.0
    %201 = vmatprep.subr.mxu0 0.0
    %202 = vmatpush1.msra.mxu0 0.0
    %203 = vmatprep.subr.mxu0 0.0
    %204 = vmatpush1.msra.mxu0 0.0
    %205 = vmatprep.subr.mxu0 0.0
    %206 = vmatpush1.msra.mxu0 0.0
    %207 = vmatprep.subr.mxu0 0.0
    %208 = vmatpush1.msra.mxu0 0.0
    %209 = vmatprep.subr.mxu0 0.0
    %210 = vmatpush1.msra.mxu0 0.0
    %211 = vmatprep.subr.mxu0 0.0
    %212 = vmatpush1.msra.mxu0 0.0
    %213 = vmatprep.subr.mxu0 0.0
    %214 = vmatpush1.msra.mxu0 0.0
    %215 = vmatprep.subr.mxu0 0.0
    %216 = vmatpush1.msra.mxu0 0.0
    %217 = vmatprep.subr.mxu0 0.0
    %218 = vmatpush1.msra.mxu0 0.0
    %219 = vmatprep.subr.mxu0 0.0
    %220 = vmatpush1.msra.mxu0 0.0
    %221 = vmatprep.subr.mxu0 0.0
    %222 = vmatpush1.msra.mxu0 0.0
    %223 = vmatprep.subr.mxu0 0.0
    %224 = vmatpush1.msra.mxu0 0.0
    %225 = vmatprep.subr.mxu0 0.0
    %226 = vmatpush1.msra.mxu0 0.0
    %227 = vmatprep.subr.mxu0 0.0
    %228 = vmatpush1.msra.mxu0 0.0
    %229 = vmatprep.subr.mxu0 0.0
    %230 = vmatpush1.msra.mxu0 0.0
    %231 = vmatprep.subr.mxu0 0.0
    %232 = vmatpush1.msra.mxu0 0.0
    %233 = vmatprep.subr.mxu0 0.0
    %234 = vmatpush1.msra.mxu0 0.0
    %235 = vmatprep.subr.mxu0 0.0
    %236 = vmatpush1.msra.mxu0 0.0
    %237 = vmatprep.subr.mxu0 0.0
    %238 = vmatpush1.msra.mxu0 0.0
    %239 = vmatprep.subr.mxu0 0.0
    %240 = vmatpush1.msra.mxu0 0.0
    %241 = vmatprep.mubr.f32.mxu0 0.0
    %242 = vmatmul.mubr.f32.gmra.mrb[0].mxu0 %v95
    %v243 = vpop.f32.mrb[0].mxu0
    %v244 = vadd.f32 %v89, %v243
    %v245 = vpop.f32.mrb[0].mxu0
    %246 = vmatprep.mubr.f32.mxu0 0.0
    %247 = vmatmul.mubr.f32.gmra.mrb[0].mxu0 %v98
    %v248 = vpop.f32.mrb[0].mxu0
    %v249 = vadd.f32 %v89, %v248
    %v250 = vpop.f32.mrb[0].mxu0
    %251 = vdwg.mxu0
    %v252 = vld [vmem:[#allocation7] sm:$0xff]
    %v253 = vld [vmem:[#allocation7 + $0x8] sm:$0xff]
    %v254 = vld [vmem:[#allocation7 + $0x10] sm:$0xff]
    %v255 = vld [vmem:[#allocation7 + $0x18] sm:$0xff]
    %v256 = vld [vmem:[#allocation7 + $0x20] sm:$0xff]
    %v257 = vld [vmem:[#allocation7 + $0x28] sm:$0xff]
    %v258 = vld [vmem:[#allocation7 + $0x30] sm:$0xff]
    %v259 = vld [vmem:[#allocation7 + $0x38] sm:$0xff]
    %v260 = vld [vmem:[#allocation7 + $0x40] sm:$0xff]
    %v261 = vld [vmem:[#allocation7 + $0x48] sm:$0xff]
    %v262 = vld [vmem:[#allocation7 + $0x50] sm:$0xff]
    %v263 = vld [vmem:[#allocation7 + $0x58] sm:$0xff]
    %v264 = vld [vmem:[#allocation7 + $0x60] sm:$0xff]
    %v265 = vld [vmem:[#allocation7 + $0x68] sm:$0xff]
    %v266 = vld [vmem:[#allocation7 + $0x70] sm:$0xff]
    %v267 = vld [vmem:[#allocation7 + $0x78] sm:$0xff]
    %v268 = vld [vmem:[#allocation7 + $0x80] sm:$0xff]
    %v269 = vld [vmem:[#allocation7 + $0x88] sm:$0xff]
    %v270 = vld [vmem:[#allocation7 + $0x90] sm:$0xff]
    %v271 = vld [vmem:[#allocation7 + $0x98] sm:$0xff]
    %v272 = vld [vmem:[#allocation7 + $0xa0] sm:$0xff]
    %v273 = vld [vmem:[#allocation7 + $0xa8] sm:$0xff]
    %v274 = vld [vmem:[#allocation7 + $0xb0] sm:$0xff]
    %v275 = vld [vmem:[#allocation7 + $0xb8] sm:$0xff]
    %v276 = vld [vmem:[#allocation7 + $0xc0] sm:$0xff]
    %v277 = vld [vmem:[#allocation7 + $0xc8] sm:$0xff]
    %v278 = vld [vmem:[#allocation7 + $0xd0] sm:$0xff]
    %v279 = vld [vmem:[#allocation7 + $0xd8] sm:$0xff]
    %v280 = vld [vmem:[#allocation7 + $0xe0] sm:$0xff]
    %v281 = vld [vmem:[#allocation7 + $0xe8] sm:$0xff]
    %v282 = vld [vmem:[#allocation7 + $0xf0] sm:$0xff]
    %v283 = vld [vmem:[#allocation7 + $0xf8] sm:$0xff]
    %v284 = vld [vmem:[#allocation7 + $0x100] sm:$0xff]
    %v285 = vld [vmem:[#allocation7 + $0x108] sm:$0xff]
    %v286 = vld [vmem:[#allocation7 + $0x110] sm:$0xff]
    %v287 = vld [vmem:[#allocation7 + $0x118] sm:$0xff]
    %v288 = vld [vmem:[#allocation7 + $0x120] sm:$0xff]
    %v289 = vld [vmem:[#allocation7 + $0x128] sm:$0xff]
    %v290 = vld [vmem:[#allocation7 + $0x130] sm:$0xff]
    %v291 = vld [vmem:[#allocation7 + $0x138] sm:$0xff]
    %v292 = vld [vmem:[#allocation7 + $0x140] sm:$0xff]
    %v293 = vld [vmem:[#allocation7 + $0x148] sm:$0xff]
    %v294 = vld [vmem:[#allocation7 + $0x150] sm:$0xff]
    %v295 = vld [vmem:[#allocation7 + $0x158] sm:$0xff]
    %v296 = vld [vmem:[#allocation7 + $0x160] sm:$0xff]
    %v297 = vld [vmem:[#allocation7 + $0x168] sm:$0xff]
    %v298 = vld [vmem:[#allocation7 + $0x170] sm:$0xff]
    %v299 = vld [vmem:[#allocation7 + $0x178] sm:$0xff]
    %v300 = vld [vmem:[%s4] sm:$0x1]
    %v302 = vlaneseq
    %v303 = vshrl.u32 %v302, 7
    %v304 = vsub.s32 0, %v303
    %v305 = vrot.slane %v300, %v304
    %307 = vmatprep.subr.mxu0 0.0
    %308 = vmatpush1.msra.mxu0 %v252
    %309 = vmatprep.subr.mxu0 0.0
    %310 = vmatpush1.msra.mxu0 %v253
    %311 = vmatprep.subr.mxu0 0.0
    %312 = vmatpush1.msra.mxu0 %v254
    %313 = vmatprep.subr.mxu0 0.0
    %314 = vmatpush1.msra.mxu0 %v255
    %315 = vmatprep.subr.mxu0 0.0
    %316 = vmatpush1.msra.mxu0 %v256
    %317 = vmatprep.subr.mxu0 0.0
    %318 = vmatpush1.msra.mxu0 %v257
    %319 = vmatprep.subr.mxu0 0.0
    %320 = vmatpush1.msra.mxu0 %v258
    %321 = vmatprep.subr.mxu0 0.0
    %322 = vmatpush1.msra.mxu0 %v259
    %323 = vmatprep.subr.mxu0 0.0
    %324 = vmatpush1.msra.mxu0 %v260
    %325 = vmatprep.subr.mxu0 0.0
    %326 = vmatpush1.msra.mxu0 %v261
    %327 = vmatprep.subr.mxu0 0.0
    %328 = vmatpush1.msra.mxu0 %v262
    %329 = vmatprep.subr.mxu0 0.0
    %330 = vmatpush1.msra.mxu0 %v263
    %331 = vmatprep.subr.mxu0 0.0
    %332 = vmatpush1.msra.mxu0 %v264
    %333 = vmatprep.subr.mxu0 0.0
    %334 = vmatpush1.msra.mxu0 %v265
    %335 = vmatprep.subr.mxu0 0.0
    %336 = vmatpush1.msra.mxu0 %v266
    %337 = vmatprep.subr.mxu0 0.0
    %338 = vmatpush1.msra.mxu0 %v267
    %339 = vmatprep.subr.mxu0 0.0
    %340 = vmatpush1.msra.mxu0 %v268
    %341 = vmatprep.subr.mxu0 0.0
    %342 = vmatpush1.msra.mxu0 %v269
    %343 = vmatprep.subr.mxu0 0.0
    %344 = vmatpush1.msra.mxu0 %v270
    %345 = vmatprep.subr.mxu0 0.0
    %346 = vmatpush1.msra.mxu0 %v271
    %347 = vmatprep.subr.mxu0 0.0
    %348 = vmatpush1.msra.mxu0 %v272
    %349 = vmatprep.subr.mxu0 0.0
    %350 = vmatpush1.msra.mxu0 %v273
    %351 = vmatprep.subr.mxu0 0.0
    %352 = vmatpush1.msra.mxu0 %v274
    %353 = vmatprep.subr.mxu0 0.0
    %354 = vmatpush1.msra.mxu0 %v275
    %355 = vmatprep.subr.mxu0 0.0
    %356 = vmatpush1.msra.mxu0 %v276
    %357 = vmatprep.subr.mxu0 0.0
    %358 = vmatpush1.msra.mxu0 %v277
    %359 = vmatprep.subr.mxu0 0.0
    %360 = vmatpush1.msra.mxu0 %v278
    %361 = vmatprep.subr.mxu0 0.0
    %362 = vmatpush1.msra.mxu0 %v279
    %363 = vmatprep.subr.mxu0 0.0
    %364 = vmatpush1.msra.mxu0 %v280
    %365 = vmatprep.subr.mxu0 0.0
    %366 = vmatpush1.msra.mxu0 %v281
    %367 = vmatprep.subr.mxu0 0.0
    %368 = vmatpush1.msra.mxu0 %v282
    %369 = vmatprep.subr.mxu0 0.0
    %370 = vmatpush1.msra.mxu0 %v283
    %371 = vmatprep.mubr.f32.mxu0 %v169
    %372 = vmatmul.mubr.f32.gmra.mrb[0].mxu0 %v167
    %v373 = vpop.f32.mrb[0].mxu0
    %v374 = vadd.f32 %v305, %v373
    %v375 = vpop.f32.mrb[0].mxu0
    %376 = vmatprep.mubr.f32.mxu0 %v175
    %377 = vmatmul.mubr.f32.gmra.mrb[0].mxu0 %v173
    %v378 = vpop.f32.mrb[0].mxu0
    %v379 = vadd.f32 %v305, %v378
    %v380 = vpop.f32.mrb[0].mxu0
    %381 = vdwg.mxu0
    %382 = vmatprep.subr.mxu0 0.0
    %383 = vmatpush1.msra.mxu0 %v284
    %384 = vmatprep.subr.mxu0 0.0
    %385 = vmatpush1.msra.mxu0 %v285
    %386 = vmatprep.subr.mxu0 0.0
    %387 = vmatpush1.msra.mxu0 %v286
    %388 = vmatprep.subr.mxu0 0.0
    %389 = vmatpush1.msra.mxu0 %v287
    %390 = vmatprep.subr.mxu0 0.0
    %391 = vmatpush1.msra.mxu0 %v288
    %392 = vmatprep.subr.mxu0 0.0
    %393 = vmatpush1.msra.mxu0 %v289
    %394 = vmatprep.subr.mxu0 0.0
    %395 = vmatpush1.msra.mxu0 %v290
    %396 = vmatprep.subr.mxu0 0.0
    %397 = vmatpush1.msra.mxu0 %v291
    %398 = vmatprep.subr.mxu0 0.0
    %399 = vmatpush1.msra.mxu0 %v292
    %400 = vmatprep.subr.mxu0 0.0
    %401 = vmatpush1.msra.mxu0 %v293
    %402 = vmatprep.subr.mxu0 0.0
    %403 = vmatpush1.msra.mxu0 %v294
    %404 = vmatprep.subr.mxu0 0.0
    %405 = vmatpush1.msra.mxu0 %v295
    %406 = vmatprep.subr.mxu0 0.0
    %407 = vmatpush1.msra.mxu0 %v296
    %408 = vmatprep.subr.mxu0 0.0
    %409 = vmatpush1.msra.mxu0 %v297
    %410 = vmatprep.subr.mxu0 0.0
    %411 = vmatpush1.msra.mxu0 %v298
    %412 = vmatprep.subr.mxu0 0.0
    %413 = vmatpush1.msra.mxu0 %v299
    %414 = vmatprep.subr.mxu0 0.0
    %415 = vmatpush1.msra.mxu0 0.0
    %416 = vmatprep.subr.mxu0 0.0
    %417 = vmatpush1.msra.mxu0 0.0
    %418 = vmatprep.subr.mxu0 0.0
    %419 = vmatpush1.msra.mxu0 0.0
    %420 = vmatprep.subr.mxu0 0.0
    %421 = vmatpush1.msra.mxu0 0.0
    %422 = vmatprep.subr.mxu0 0.0
    %423 = vmatpush1.msra.mxu0 0.0
    %424 = vmatprep.subr.mxu0 0.0
    %425 = vmatpush1.msra.mxu0 0.0
    %426 = vmatprep.subr.mxu0 0.0
    %427 = vmatpush1.msra.mxu0 0.0
    %428 = vmatprep.subr.mxu0 0.0
    %429 = vmatpush1.msra.mxu0 0.0
    %430 = vmatprep.subr.mxu0 0.0
    %431 = vmatpush1.msra.mxu0 0.0
    %432 = vmatprep.subr.mxu0 0.0
    %433 = vmatpush1.msra.mxu0 0.0
    %434 = vmatprep.subr.mxu0 0.0
    %435 = vmatpush1.msra.mxu0 0.0
    %436 = vmatprep.subr.mxu0 0.0
    %437 = vmatpush1.msra.mxu0 0.0
    %438 = vmatprep.subr.mxu0 0.0
    %439 = vmatpush1.msra.mxu0 0.0
    %440 = vmatprep.subr.mxu0 0.0
    %441 = vmatpush1.msra.mxu0 0.0
    %442 = vmatprep.subr.mxu0 0.0
    %443 = vmatpush1.msra.mxu0 0.0
    %444 = vmatprep.subr.mxu0 0.0
    %445 = vmatpush1.msra.mxu0 0.0
    %446 = vmatprep.mubr.f32.mxu0 0.0
    %447 = vmatmul.mubr.f32.gmra.mrb[0].mxu0 %v244
    %v448 = vpop.f32.mrb[0].mxu0
    %v449 = vadd.f32 %v374, %v448
    %v450 = vpop.f32.mrb[0].mxu0
    %451 = vmatprep.mubr.f32.mxu0 0.0
    %452 = vmatmul.mubr.f32.gmra.mrb[0].mxu0 %v249
    %v453 = vpop.f32.mrb[0].mxu0
    %v454 = vadd.f32 %v379, %v453
    %v455 = vpop.f32.mrb[0].mxu0
    %456 = vdwg.mxu0
    %457 = vmax.xlane.f32.xlu0 %v449
    %v458 = vpop.xlane.xlu0 %457
    %459 = vmax.xlane.f32.xlu0 %v454
    %v460 = vpop.xlane.xlu0 %459
    %v461 = vsub.f32 %v449, %v458
    %v462 = vsub.f32 %v454, %v460
    %v463 = vmul.f32 %v461, 1.442695
    %v464 = vpow.pop %v463
    %v465 = vmul.f32 %v462, 1.442695
    %v466 = vpow.pop %v465
    %467 = vadd.xlane.f32.xlu0 %v464
    %v468 = vpop.xlane.xlu0 %467
    %469 = vadd.xlane.f32.xlu0 %v466
    %v470 = vpop.xlane.xlu0 %469
    %v471 = vlog2.pop %v468
    %v472 = vmul.f32 %v471, 0.6931472
    %v473 = vlog2.pop %v470
    %v474 = vmul.f32 %v473, 0.6931472
    %v475 = vsub.f32 %v461, %v472
    %v476 = vsub.f32 %v462, %v474
    %477 = vst [vmem:[#allocation8] sm:$0xff] %v475
    %478 = vst [vmem:[#allocation8 + $0x8] sm:$0xff] %v476
    // Predicated region
    $region34: #{tpu_custom_call.1} parent=1 // pred_check
      _
    $region35: #{tpu_custom_call.1} parent=1 // pred_check_branch
      %480 = sbr.rel (0) target = $region37
    $region36: #{tpu_custom_call.1} parent=1 // pred_region
      %s482 = ssub.s32 256, 256
      %483 = vsyncadd [#allocation4], %s482
      %s484 = sshll.u32 [#allocation8], 4
      %s485 = int_to_ptr.vmem [resolvable:$true] %s484
      %490 = dma.vmem_to_hbm [thread:$0]  %s485, 256, %s5, [#allocation4], 128, 128, 8
    $region37: #{tpu_custom_call.1} parent=1 // pred_fallthru
      _
    // Predicated region
    $region38: #{tpu_custom_call.1} parent=1 // pred_check
      _
    $region39: #{tpu_custom_call.1} parent=1 // pred_check_branch
      %492 = sbr.rel (0) target = $region41
    $region40: #{tpu_custom_call.1} parent=1 // pred_region
      %493 = dma.done [#allocation4], 256
    $region41: #{tpu_custom_call.1} parent=1 // pred_fallthru
      _
    %494 = vsyncpa [#allocation3], 1
    %495 = vsyncpa [#allocation6], 1
    %496 = vsyncpa [#allocation4], 1

</llo_original>
